<compile_context>
chip_gen: v6e
topology: v6e:2x2x1
jax: 0.10.0
libtpu: 0.0.40
codegen_flags: <defaults>
</compile_context>

<pallas_src>
import jax
import jax.numpy as jnp
from jax.experimental import pallas as pl
from jax.experimental.pallas import tpu as pltpu

DIM_IN = 256
DIM_HIDDEN = 32
DIM_PRED = 1

# 8192 rows * 256 cols * 4 B = 8 MiB per x tile, 16 MiB double-buffered.
MAX_BLOCK_B = 8192
_VMEM_LIMIT_BYTES = 32 * 1024 * 1024  # covers 8 MiB x-tile x2 on every gen


def _affine_kernel(x_ref, w_ref, b_ref, o_ref):
    # x_ref: (TB, K) f32   w_ref: (1, K) f32   b_ref: (1, 1) f32
    # GEMV without the MXU: elementwise multiply on the VPU (VALU slot) and a
    # lane reduce on the XLU (its own slot) — both hide under the x-tile DMA.
    prod = x_ref[...] * w_ref[...]                      # (TB, K)
    o_ref[...] = (
        jnp.sum(prod, axis=-1, keepdims=True) + b_ref[...]
    ).astype(o_ref.dtype)


def _pick_block_b(B):
    """Batch-tile size: big (amortize step overhead), sublane-aligned, and
    producing >= 2 grid steps when B is large enough (v7x megacore)."""
    if B <= 16:
        return B  # single full-batch tile; block == full dim is always legal
    half = (B + 1) // 2
    half = ((half + 7) // 8) * 8          # round up to a multiple of 8
    return min(MAX_BLOCK_B, half)


def _fused_affine(x, w_row, b_eff):
    """x: [B, K] f32, w_row: [1, K] f32, b_eff: [1, 1] f32 -> [B, 1] f32."""
    B, K = x.shape
    N = b_eff.shape[1]
    assert N == 1, "VPU GEMV path assumes dim_pred == 1 (module default)."

    block_b = _pick_block_b(B)
    grid = (pl.cdiv(B, block_b),)
    # Ragged last block: padded rows compute garbage that is never written
    # back (rows are independent) -- keep that invariant.

    cost = pl.CostEstimate(
        flops=2 * B * K * N,
        transcendentals=0,
        bytes_accessed=(B * K + K * N + N + B * N) * 4,
    )

    return pl.pallas_call(
        _affine_kernel,
        out_shape=jax.ShapeDtypeStruct((B, N), jnp.float32),
        grid=grid,
        in_specs=[
            pl.BlockSpec((block_b, K), lambda i: (i, 0)),  # streamed x tile
            pl.BlockSpec((1, K), lambda i: (0, 0)),        # resident weight row
            pl.BlockSpec((1, N), lambda i: (0, 0)),        # resident bias
        ],
        out_specs=pl.BlockSpec((block_b, N), lambda i: (i, 0)),
        compiler_params=pltpu.CompilerParams(
            # Independent batch tiles: lets the v7x megacore split the grid.
            dimension_semantics=("parallel",),
            vmem_limit_bytes=_VMEM_LIMIT_BYTES,
            # Allow XLA to fuse x's producer into the kernel input (x only).
            allow_input_fusion=[True, False, False],
        ),
        cost_estimate=cost,
    )(x, w_row, b_eff)


def collapse_params(params):
    """Fold the 3 bias-only linear layers into one affine map (default config
    only: no act, no norm, eval-mode dropout).  Note: f32 rounding order
    differs slightly from sequential layers; contract is ~1e-4 allclose."""
    w1, b1, w2, b2, w3, b3 = params
    w_eff = w1 @ w2 @ w3                       # [DIM_IN, DIM_PRED]
    b_eff = b1 @ w2 @ w3 + b2 @ w3 + b3        # [1, DIM_PRED]
    return w_eff, b_eff


def mlp_forward(x, params):
    """Reproduces MLP.forward (default config) for f32 inputs."""
    w_eff, b_eff = collapse_params(params)
    w_row = w_eff.T                            # [1, DIM_IN] row vector for VPU GEMV
    return _fused_affine(x, w_row, b_eff)


def init_params(key):
    """PyTorch nn.Linear default init: U(-1/sqrt(fan_in), 1/sqrt(fan_in)).
    Weights stored [in, out] (transpose of PyTorch); biases [1, out]."""
    dims = [(DIM_IN, DIM_HIDDEN), (DIM_HIDDEN, DIM_HIDDEN), (DIM_HIDDEN, DIM_PRED)]
    params = []
    for (din, dout) in dims:
        key, kw, kb = jax.random.split(key, 3)
        bound = 1.0 / jnp.sqrt(din)
        w = jax.random.uniform(kw, (din, dout), jnp.float32, -bound, bound)
        b = jax.random.uniform(kb, (1, dout), jnp.float32, -bound, bound)
        params += [w, b]
    return tuple(params)


if __name__ == "__main__":
    key = jax.random.PRNGKey(0)
    key, kx, kx2 = jax.random.split(key, 3)
    params = init_params(key)

    fwd = jax.jit(lambda xv: mlp_forward(xv, params))

    # Pure-JAX reference with the layers kept separate (checks the collapse).
    def ref(xv):
        w1, b1, w2, b2, w3, b3 = params
        h = xv @ w1 + b1          # Dropout(p=0.5) eval-mode = identity
        h = h @ w2 + b2           # Dropout(p=0.5) eval-mode = identity
        return h @ w3 + b3

    # Small batch of dim_in=256 feature vectors.
    x = jax.random.normal(kx, (8, DIM_IN), dtype=jnp.float32)
    out = jax.block_until_ready(fwd(x))
    assert out.shape == (8, DIM_PRED), out.shape
    assert jnp.allclose(out, ref(x), atol=1e-4, rtol=1e-4)

    # Batch==1 path (no repeat trick needed: norm_layer=None).
    x1 = x[:1]
    out1 = jax.block_until_ready(fwd(x1))
    assert out1.shape == (1, DIM_PRED), out1.shape
    assert jnp.allclose(out1, ref(x1), atol=1e-4, rtol=1e-4)

    # Multi-tile grid with a ragged last block (exercises the 2-step grid path).
    x2 = jax.random.normal(kx2, (40, DIM_IN), dtype=jnp.float32)
    out2 = jax.block_until_ready(jax.jit(lambda xv: mlp_forward(xv, params))(x2))
    assert out2.shape == (40, DIM_PRED), out2.shape
    assert jnp.allclose(out2, ref(x2), atol=1e-4, rtol=1e-4)

    print("KERNEL_OK")
</pallas_src>

<mosaic_0001>
module attributes {stable_mosaic.version = 11 : i64} {
  func.func @_affine_kernel(%arg0: i32, %arg1: memref<8x256xf32, #tpu.memory_space<vmem>>, %arg2: memref<1x256xf32, #tpu.memory_space<vmem>>, %arg3: memref<1x1xf32, #tpu.memory_space<vmem>>, %arg4: memref<8x1xf32, #tpu.memory_space<vmem>>) attributes {dimension_semantics = [#tpu.dimension_semantics<parallel>], iteration_bounds = array<i64: 1>, scalar_prefetch = 0 : i64, scratch_operands = 0 : i64, tpu.core_type = #tpu.core_type<tc>, window_params = [{transform_indices = @transform_0, window_bounds = array<i64: 8, 256>}, {pipeline_mode = #tpu.pipeline_mode<synchronous>, transform_indices = @transform_1, window_bounds = array<i64: 1, 256>}, {pipeline_mode = #tpu.pipeline_mode<synchronous>, transform_indices = @transform_2, window_bounds = array<i64: 1, 1>}, {transform_indices = @transform_3, window_bounds = array<i64: 8, 1>}]} {
    %c0 = arith.constant 0 : index
    %c0_0 = arith.constant 0 : index
    %0 = vector.load %arg1[%c0, %c0_0] : memref<8x256xf32, #tpu.memory_space<vmem>>, vector<8x256xf32>
    %c0_1 = arith.constant 0 : index
    %c0_2 = arith.constant 0 : index
    %1 = vector.load %arg2[%c0_1, %c0_2] : memref<1x256xf32, #tpu.memory_space<vmem>>, vector<1x256xf32>
    %2 = vector.broadcast %1 : vector<1x256xf32> to vector<8x256xf32>
    %3 = arith.mulf %0, %2 : vector<8x256xf32>
    %cst = arith.constant dense<0.000000e+00> : vector<8xf32>
    %4 = vector.multi_reduction <add>, %3, %cst [1] : vector<8x256xf32> to vector<8xf32>
    %5 = vector.shape_cast %4 : vector<8xf32> to vector<8x1xf32>
    %c0_3 = arith.constant 0 : index
    %c0_4 = arith.constant 0 : index
    %6 = vector.load %arg3[%c0_3, %c0_4] : memref<1x1xf32, #tpu.memory_space<vmem>>, vector<1x1xf32>
    %7 = vector.broadcast %6 : vector<1x1xf32> to vector<8x1xf32>
    %8 = arith.addf %5, %7 : vector<8x1xf32>
    %c0_5 = arith.constant 0 : index
    %c0_6 = arith.constant 0 : index
    %9 = vector.load %arg4[%c0_5, %c0_6] : memref<8x1xf32, #tpu.memory_space<vmem>>, vector<8x1xf32>
    tpu.vector_store %arg4[%c0_5, %c0_6], %8 {strides = array<i32>} : memref<8x1xf32, #tpu.memory_space<vmem>>, vector<8x1xf32>,
    return
  }
  func.func @transform_0(%arg0: i32) -> (i32, i32) {
    %c0_i32 = arith.constant 0 : i32
    %c0_i32_0 = arith.constant 0 : i32
    return %arg0, %c0_i32 : i32, i32
  }
  func.func @transform_1(%arg0: i32) -> (i32, i32) {
    %c0_i32 = arith.constant 0 : i32
    %c0_i32_0 = arith.constant 0 : i32
    %c0_i32_1 = arith.constant 0 : i32
    return %c0_i32, %c0_i32_0 : i32, i32
  }
  func.func @transform_2(%arg0: i32) -> (i32, i32) {
    %c0_i32 = arith.constant 0 : i32
    %c0_i32_0 = arith.constant 0 : i32
    %c0_i32_1 = arith.constant 0 : i32
    return %c0_i32, %c0_i32_0 : i32, i32
  }
  func.func @transform_3(%arg0: i32) -> (i32, i32) {
    %c0_i32 = arith.constant 0 : i32
    %c0_i32_0 = arith.constant 0 : i32
    return %arg0, %c0_i32 : i32, i32
  }
}

</mosaic_0001>

<llo_original>
// kernel: _lambda_.1
$region0: #{_lambda_.1}
  #allocation0 [shape = 'u32[]', space=smem, size = 0x4, offset = 0x4, fixed_abs, tag = 'smem constant byte address 0x4 - core index']
  #allocation1 [shape = 'u32[144,128]{1,0:T(1,128)}', space=vmem, size = 0x12000, scoped, tag = 'internal scratch']
  #allocation2 [shape = 'f32[1,1]{1,0:T(1,128)S(1)}', space=vmem, size = 0x200, scoped, tag = 'scoped memory for _lambda_.1']
  %s0 = inlined_call_operand.hbm [shape: f32[8,256], index: 0, kind: input, shape index: {}]
  %s1 = inlined_call_operand.hbm [shape: f32[1,256], index: 1, kind: input, shape index: {}]
  %s2 = inlined_call_operand.<no memory space> [shape: f32[1,1], index: 2, kind: input, shape index: {}]
  %s3 = inlined_call_operand.vmem [shape: f32[8,1], index: 3, kind: output, shape index: {}]
  %s4 = sld [smem:[#allocation0]]
  $region30: #{_lambda_.1} parent=0
    _
  %s6 = ssub.s32 1, %s4
  %s7 = scalar_select 0, %s6, %s4
  %v8 = vstv %s2
  %9 = vst [vmem:[#allocation2] sm:$0x1] %v8
  $region1: #{_lambda_.1} parent=0
    #allocation3 [shape = 'u8[8192]{0}', space=vmem, size = 0x2000, scoped, tag = 'input window, operand 0, single buffered']
    #allocation4 [shape = 's32[1]{0}', space=sflag, size = 0x4, scoped, tag = 'scoped memory for _lambda_.1']
    #allocation5 [shape = 'u8[1024]{0}', space=vmem, size = 0x400, scoped, tag = 'input window, operand 1, single buffered']
    #allocation6 [shape = 's32[1]{0}', space=sflag, size = 0x4, scoped, tag = 'scoped memory for _lambda_.1']
    %10 = vsyncpa [#allocation4], 0
    %11 = vsyncpa [#allocation6], 0
    // Predicated region
    $region2: #{_lambda_.1} parent=1 // pred_check
      _
    $region3: #{_lambda_.1} parent=1 // pred_check_branch
      %13 = sbr.rel (0) target = $region5
    $region4: #{_lambda_.1} parent=1 // pred_region
      %s15 = ssub.s32 256, 256
      %16 = vsyncadd [#allocation4], %s15
      %s18 = sshll.u32 [#allocation3], 4
      %s19 = int_to_ptr.vmem [resolvable:$true] %s18
      %21 = dma.hbm_to_vmem [thread:$0]  %s0, 256, %s19, [#allocation4]
    $region5: #{_lambda_.1} parent=1 // pred_fallthru
      _
    // Predicated region
    $region6: #{_lambda_.1} parent=1 // pred_check
      _
    $region7: #{_lambda_.1} parent=1 // pred_check_branch
      %23 = sbr.rel (0) target = $region9
    $region8: #{_lambda_.1} parent=1 // pred_region
      %s25 = ssub.s32 32, 32
      %26 = vsyncadd [#allocation6], %s25
      %s28 = sshll.u32 [#allocation5], 4
      %s29 = int_to_ptr.vmem [resolvable:$true] %s28
      %31 = dma.hbm_to_vmem [thread:$0]  %s1, 32, %s29, [#allocation6]
    $region9: #{_lambda_.1} parent=1 // pred_fallthru
      _
    // Predicated region
    $region10: #{_lambda_.1} parent=1 // pred_check
      _
    $region11: #{_lambda_.1} parent=1 // pred_check_branch
      %33 = sbr.rel (0) target = $region13
    $region12: #{_lambda_.1} parent=1 // pred_region
      _
    $region13: #{_lambda_.1} parent=1 // pred_fallthru
      _
    // Predicated region
    $region14: #{_lambda_.1} parent=1 // pred_check
      _
    $region15: #{_lambda_.1} parent=1 // pred_check_branch
      %35 = sbr.rel (0) target = $region17
    $region16: #{_lambda_.1} parent=1 // pred_region
      %36 = dma.done [#allocation4], 256
    $region17: #{_lambda_.1} parent=1 // pred_fallthru
      _
    // Predicated region
    $region18: #{_lambda_.1} parent=1 // pred_check
      _
    $region19: #{_lambda_.1} parent=1 // pred_check_branch
      %38 = sbr.rel (0) target = $region21
    $region20: #{_lambda_.1} parent=1 // pred_region
      %39 = dma.done [#allocation6], 32
    $region21: #{_lambda_.1} parent=1 // pred_fallthru
      _
    %v40 = vld [vmem:[#allocation3] sm:$0xff]
    %v41 = vld [vmem:[#allocation3 + $0x8] sm:$0xff]
    %v42 = vld [vmem:[#allocation5] sm:$0x3]
    %v44 = vlaneseq
    %v45 = vshrl.u32 %v44, 7
    %v46 = vsub.s32 0, %v45
    %v47 = vrot.slane %v42, %v46
    %v48 = vlaneseq
    %v49 = vshrl.u32 %v48, 7
    %v50 = vsub.s32 1, %v49
    %v51 = vrot.slane %v42, %v50
    %v54 = vmul.f32 %v40, %v47
    %v55 = vmul.f32 %v41, %v51
    %v56 = vadd.f32 %v54, %v55
    %57 = vadd.xlane.f32.xlu0 %v56
    %v58 = vpop.xlane.xlu0 %57
    %v59 = vld [vmem:[#allocation2] sm:$0x1]
    %v61 = vlaneseq
    %v62 = vshrl.u32 %v61, 7
    %v63 = vsub.s32 0, %v62
    %v64 = vrot.slane %v59, %v63
    %v66 = vadd.f32 %v58, %v64
    %vm67 = vcmask 7168
    %68 = vst.msk [vmem:[%s3] sm:$0xff] %vm67, %v66
    // Predicated region
    $region22: #{_lambda_.1} parent=1 // pred_check
      _
    $region23: #{_lambda_.1} parent=1 // pred_check_branch
      %70 = sbr.rel (0) target = $region25
    $region24: #{_lambda_.1} parent=1 // pred_region
      _
    $region25: #{_lambda_.1} parent=1 // pred_fallthru
      _
    // Predicated region
    $region26: #{_lambda_.1} parent=1 // pred_check
      _
    $region27: #{_lambda_.1} parent=1 // pred_check_branch
      %72 = sbr.rel (0) target = $region29
    $region28: #{_lambda_.1} parent=1 // pred_region
      _
    $region29: #{_lambda_.1} parent=1 // pred_fallthru
      _
    %73 = vsyncpa [#allocation4], 1
    %74 = vsyncpa [#allocation6], 1

</llo_original>
